<compile_context>
chip_gen: v7x
topology: tpu7x:2x2x1
jax: 0.10.0
libtpu: 0.0.40
codegen_flags: <defaults>
</compile_context>

<pallas_src>
import jax
import jax.numpy as jnp
from jax.experimental import pallas as pl
from jax.experimental.pallas import tpu as pltpu


def _round_up(v, m):
    return (v + m - 1) // m * m


def _vmem_budget():
    """(per-step tile-bytes budget, vmem_limit cap), by TPU generation."""
    try:
        kind = jax.devices()[0].device_kind.lower()
    except Exception:
        kind = ""
    if "v5" in kind or "v6" in kind:
        # 128 MiB physical VMEM: allow big tiles (fewer W1 re-streams).
        return 80 * 1024 * 1024, 100 * 1024 * 1024
    # Conservative default that is safe on v7x (64 MiB physical VMEM).
    return 36 * 1024 * 1024, 52 * 1024 * 1024


def _tile_bytes(tb, tk, th, np_):
    """Rough per-grid-step VMEM footprint (double-buffered pipeline)."""
    per = (tb * tk * 2        # x tile (bf16)
           + tk * th * 2      # W1 tile (bf16)
           + 8 * th * 4       # b1 (f32, sublane-padded)
           + th * np_ * 2     # W2 tile (bf16)
           + 8 * np_ * 4      # b2 (f32)
           + tb * th * 4      # feature tile (f32, accumulated in place)
           + tb * np_ * 4)    # logits tile (f32, resident over j and k)
    return 2 * per


def _choose_tiles(in_dim, hidden, nclass, budget, tb_max=256):
    """Pick (tb, tk, th, Np) that fit the VMEM budget; all 8/128-aligned."""
    np_ = _round_up(nclass, 128)
    kp0 = _round_up(in_dim, 128)
    hp0 = _round_up(hidden, 128)
    tb = tb_max
    tk = min(512, kp0)
    th = min(4096, hp0)
    for _ in range(32):
        if _tile_bytes(tb, tk, th, np_) <= budget:
            break
        if tk > 128:                              # shrink contraction tile first
            tk = max(128, _round_up(tk // 2, 128))
        elif th > 128:                            # then tile the hidden dim
            th = max(128, _round_up(th // 2, 128))
        elif tb > 8:                              # last resort: smaller batch tile
            tb = max(8, tb // 2)
        else:
            break
    return tb, tk, th, np_


def prepare_params(w1, b1, w2, b2, *, max_batch_tile=256):
    """One-time cast/pad of the weights to bf16, lane-dense (128-padded) tiles.

    Hoisted out of the per-call path: doing this per forward would add a full
    f32 read + bf16 write of W1/W2 (an extra HBM round-trip bigger than the
    kernel's own weight traffic).
    """
    in_dim, hidden = w1.shape
    nclass = w2.shape[1]
    budget, limit_cap = _vmem_budget()
    tb_max, tk, th, np_ = _choose_tiles(in_dim, hidden, nclass, budget, max_batch_tile)
    kp = _round_up(in_dim, tk)
    hp = _round_up(hidden, th)

    bf16, f32 = jnp.bfloat16, jnp.float32
    w1p = jnp.zeros((kp, hp), bf16).at[:in_dim, :hidden].set(w1.astype(bf16))
    b1p = jnp.zeros((1, hp), f32).at[:, :hidden].set(
        jnp.asarray(b1, f32).reshape(1, hidden))
    w2p = jnp.zeros((hp, np_), bf16).at[:hidden, :nclass].set(w2.astype(bf16))
    b2p = jnp.zeros((1, np_), f32).at[:, :nclass].set(
        jnp.asarray(b2, f32).reshape(1, nclass))
    return dict(w1=w1p, b1=b1p, w2=w2p, b2=b2p,
                in_dim=in_dim, hidden=hidden, nclass=nclass,
                tb_max=tb_max, tk=tk, th=th, vmem_limit_cap=limit_cap)


def _mlp_kernel(x_ref, w1_ref, b1_ref, w2_ref, b2_ref, feat_ref, logit_ref):
    """One (batch-tile i, hidden-tile j, K-tile k) grid step.

    feature (f32) is resident over k -> accumulate x@W1 directly into it.
    logits  (f32) is resident over j and k -> init with b2 once, then add this
    hidden tile's contribution feat_j @ W2_j on the last K step of every j.
    """
    j = pl.program_id(1)
    k = pl.program_id(2)
    last_k = pl.num_programs(2) - 1

    @pl.when(k == 0)
    def _():
        feat_ref[...] = jnp.zeros_like(feat_ref)

    @pl.when((j == 0) & (k == 0))
    def _():
        logit_ref[...] = jnp.broadcast_to(b2_ref[...], logit_ref.shape)

    # First matmul: accumulate this K-slice on the MXU in f32, in the output.
    feat_ref[...] += jnp.dot(x_ref[...], w1_ref[...],
                             preferred_element_type=jnp.float32)

    @pl.when(k == last_k)
    def _():
        feat = feat_ref[...] + b1_ref[...]
        feat_ref[...] = feat
        # Second matmul: this hidden tile's contribution to the logits.
        logit_ref[...] += jnp.dot(feat.astype(w2_ref.dtype), w2_ref[...],
                                  preferred_element_type=jnp.float32)


def mlp_forward(x, params):
    """feature = x @ W1 + b1 ; logits = feature @ W2 + b2 (bf16 MXU, f32 acc).

    x: (B, ...) float32, flattened row-major like torch's x.view(B, -1).
    Returns (feature (B, hidden) f32, logits (B, nclass) f32).
    """
    B = x.shape[0]
    in_dim, hidden, nclass = params["in_dim"], params["hidden"], params["nclass"]
    tk, th = params["tk"], params["th"]
    kp, hp = params["w1"].shape
    np_ = params["w2"].shape[1]

    x2d = jnp.reshape(x, (B, -1))
    assert x2d.shape[1] == in_dim, "flattened input dim mismatch"

    tb = min(params["tb_max"], _round_up(B, 8))
    bp = _round_up(B, tb)

    x_bf = x2d.astype(jnp.bfloat16)
    if bp != B or kp != in_dim:
        xp = jnp.zeros((bp, kp), jnp.bfloat16).at[:B, :in_dim].set(x_bf)
    else:
        xp = x_bf                                  # skip pad when already aligned

    grid = (bp // tb, hp // th, kp // tk)
    est = _tile_bytes(tb, tk, th, np_)
    vmem_limit = int(min(max(est * 5 // 4 + (2 << 20), 32 * 1024 * 1024),
                         params["vmem_limit_cap"]))

    feat_p, logits_p = pl.pallas_call(
        _mlp_kernel,
        out_shape=(
            jax.ShapeDtypeStruct((bp, hp), jnp.float32),
            jax.ShapeDtypeStruct((bp, np_), jnp.float32),
        ),
        grid_spec=pltpu.PrefetchScalarGridSpec(
            num_scalar_prefetch=0,
            grid=grid,
            in_specs=[
                pl.BlockSpec((tb, tk), lambda i, j, k: (i, k)),    # x tile
                pl.BlockSpec((tk, th), lambda i, j, k: (k, j)),    # W1 (K,H) tile
                pl.BlockSpec((1, th), lambda i, j, k: (0, j)),     # b1 slice
                pl.BlockSpec((th, np_), lambda i, j, k: (j, 0)),   # W2 (H,N) tile
                pl.BlockSpec((1, np_), lambda i, j, k: (0, 0)),    # b2
            ],
            out_specs=[
                pl.BlockSpec((tb, th), lambda i, j, k: (i, j)),    # feature
                pl.BlockSpec((tb, np_), lambda i, j, k: (i, 0)),   # logits
            ],
        ),
        compiler_params=pltpu.CompilerParams(
            dimension_semantics=("parallel", "arbitrary", "arbitrary"),
            vmem_limit_bytes=vmem_limit,
        ),
    )(xp, params["w1"], params["b1"], params["w2"], params["b2"])

    feat = feat_p if (bp == B and hp == hidden) else feat_p[:B, :hidden]
    logits = logits_p if (bp == B and np_ == nclass) else logits_p[:B, :nclass]
    return feat, logits


def init_params(key, in_dim, hidden_dim, class_num):
    """Deterministic synthetic init mirroring nn.Linear (weights stored transposed)."""
    k1, k2, k3, k4 = jax.random.split(key, 4)
    bound1 = 1.0 / jnp.sqrt(in_dim)
    bound2 = 1.0 / jnp.sqrt(hidden_dim)
    w1 = jax.random.uniform(k1, (in_dim, hidden_dim), jnp.float32, -bound1, bound1)
    b1 = jax.random.uniform(k2, (hidden_dim,), jnp.float32, -bound1, bound1)
    w2 = jax.random.uniform(k3, (hidden_dim, class_num), jnp.float32, -bound2, bound2)
    b2 = jax.random.uniform(k4, (class_num,), jnp.float32, -bound2, bound2)
    return w1, b1, w2, b2


if __name__ == "__main__":
    # Small shapes consistent with the module: image_size=(16,16) -> input_dim=256,
    # hidden_dim=128, class_num=10, batch=2, single channel.
    B, C, H, W = 2, 1, 16, 16
    hidden_dim, class_num = 128, 10
    in_dim = C * H * W

    key = jax.random.PRNGKey(0)
    kx, kp = jax.random.split(key)
    x = jax.random.normal(kx, (B, C, H, W), jnp.float32)
    w1, b1, w2, b2 = init_params(kp, in_dim, hidden_dim, class_num)

    # One-time weight cast/pad (hoisted out of the per-call hot path).
    params = prepare_params(w1, b1, w2, b2)

    feat, logits = mlp_forward(x, params)
    jax.block_until_ready((feat, logits))
    assert feat.shape == (B, hidden_dim) and logits.shape == (B, class_num)

    # Reference with the same bf16-operand / f32-accumulation precision contract.
    x2d = x.reshape(B, -1)
    ref_feat = jnp.dot(x2d.astype(jnp.bfloat16), w1.astype(jnp.bfloat16),
                       preferred_element_type=jnp.float32) + b1[None, :]
    ref_logits = jnp.dot(ref_feat.astype(jnp.bfloat16), w2.astype(jnp.bfloat16),
                         preferred_element_type=jnp.float32) + b2[None, :]
    assert jnp.allclose(feat, ref_feat, atol=2e-2, rtol=2e-2)
    assert jnp.allclose(logits, ref_logits, atol=2e-2, rtol=2e-2)

    print("KERNEL_OK")
</pallas_src>

<mosaic_0001>
module attributes {stable_mosaic.version = 11 : i64} {
  func.func @_mlp_kernel(%arg0: i32, %arg1: i32, %arg2: i32, %arg3: memref<8x256xbf16, #tpu.memory_space<vmem>>, %arg4: memref<256x128xbf16, #tpu.memory_space<vmem>>, %arg5: memref<1x128xf32, #tpu.memory_space<vmem>>, %arg6: memref<128x128xbf16, #tpu.memory_space<vmem>>, %arg7: memref<1x128xf32, #tpu.memory_space<vmem>>, %arg8: memref<8x128xf32, #tpu.memory_space<vmem>>, %arg9: memref<8x128xf32, #tpu.memory_space<vmem>>) attributes {dimension_semantics = [#tpu.dimension_semantics<parallel>, #tpu.dimension_semantics<arbitrary>, #tpu.dimension_semantics<arbitrary>], iteration_bounds = array<i64: 1, 1, 1>, scalar_prefetch = 0 : i64, scratch_operands = 0 : i64, tpu.core_type = #tpu.core_type<tc>, window_params = [{transform_indices = @transform_0, window_bounds = array<i64: 8, 256>}, {transform_indices = @transform_1, window_bounds = array<i64: 256, 128>}, {transform_indices = @transform_2, window_bounds = array<i64: 1, 128>}, {transform_indices = @transform_3, window_bounds = array<i64: 128, 128>}, {pipeline_mode = #tpu.pipeline_mode<synchronous>, transform_indices = @transform_4, window_bounds = array<i64: 1, 128>}, {transform_indices = @transform_5, window_bounds = array<i64: 8, 128>}, {transform_indices = @transform_6, window_bounds = array<i64: 8, 128>}]} {
    %c0_i32 = arith.constant 0 : i32
    %0 = arith.cmpi eq, %arg2, %c0_i32 : i32
    %1 = arith.extui %0 : i1 to i32
    %c0_i32_0 = arith.constant 0 : i32
    %2 = arith.cmpi ne, %1, %c0_i32_0 : i32
    scf.if %2 {
      %cst_13 = arith.constant 0.000000e+00 : f32
      %17 = vector.broadcast %cst_13 : f32 to vector<8x128xf32>
      %c0_14 = arith.constant 0 : index
      %c0_15 = arith.constant 0 : index
      %18 = vector.load %arg8[%c0_14, %c0_15] : memref<8x128xf32, #tpu.memory_space<vmem>>, vector<8x128xf32>
      tpu.vector_store %arg8[%c0_14, %c0_15], %17 {strides = array<i32>} : memref<8x128xf32, #tpu.memory_space<vmem>>, vector<8x128xf32>,
    } else {
    }
    %c0_i32_1 = arith.constant 0 : i32
    %3 = arith.cmpi eq, %arg1, %c0_i32_1 : i32
    %c0_i32_2 = arith.constant 0 : i32
    %4 = arith.cmpi eq, %arg2, %c0_i32_2 : i32
    %5 = arith.andi %3, %4 : i1
    %6 = arith.extui %5 : i1 to i32
    %c0_i32_3 = arith.constant 0 : i32
    %7 = arith.cmpi ne, %6, %c0_i32_3 : i32
    scf.if %7 {
      %c0_13 = arith.constant 0 : index
      %c0_14 = arith.constant 0 : index
      %17 = vector.load %arg7[%c0_13, %c0_14] : memref<1x128xf32, #tpu.memory_space<vmem>>, vector<1x128xf32>
      %18 = vector.shape_cast %17 : vector<1x128xf32> to vector<1x128xf32>
      %19 = vector.broadcast %18 : vector<1x128xf32> to vector<8x128xf32>
      %c0_15 = arith.constant 0 : index
      %c0_16 = arith.constant 0 : index
      %20 = vector.load %arg9[%c0_15, %c0_16] : memref<8x128xf32, #tpu.memory_space<vmem>>, vector<8x128xf32>
      tpu.vector_store %arg9[%c0_15, %c0_16], %19 {strides = array<i32>} : memref<8x128xf32, #tpu.memory_space<vmem>>, vector<8x128xf32>,
    } else {
    }
    %c0 = arith.constant 0 : index
    %c0_4 = arith.constant 0 : index
    %8 = vector.load %arg8[%c0, %c0_4] : memref<8x128xf32, #tpu.memory_space<vmem>>, vector<8x128xf32>
    %c0_5 = arith.constant 0 : index
    %c0_6 = arith.constant 0 : index
    %9 = vector.load %arg3[%c0_5, %c0_6] : memref<8x256xbf16, #tpu.memory_space<vmem>>, vector<8x256xbf16>
    %c0_7 = arith.constant 0 : index
    %c0_8 = arith.constant 0 : index
    %10 = vector.load %arg4[%c0_7, %c0_8] : memref<256x128xbf16, #tpu.memory_space<vmem>>, vector<256x128xbf16>
    %cst = arith.constant dense<0.000000e+00> : vector<8x128xf32>
    %11 = tpu.matmul %9, %10, %cst {dimension_numbers = #tpu.dot_dimension_numbers<[1], [0], [0], [1], [0, 0, 1, 1], [], []>} : vector<8x256xbf16>, vector<256x128xbf16>, vector<8x128xf32> -> vector<8x128xf32>
    %12 = arith.addf %8, %11 : vector<8x128xf32>
    %c0_9 = arith.constant 0 : index
    %c0_10 = arith.constant 0 : index
    %13 = vector.load %arg8[%c0_9, %c0_10] : memref<8x128xf32, #tpu.memory_space<vmem>>, vector<8x128xf32>
    tpu.vector_store %arg8[%c0_9, %c0_10], %12 {strides = array<i32>} : memref<8x128xf32, #tpu.memory_space<vmem>>, vector<8x128xf32>,
    %c0_i32_11 = arith.constant 0 : i32
    %14 = arith.cmpi eq, %arg2, %c0_i32_11 : i32
    %15 = arith.extui %14 : i1 to i32
    %c0_i32_12 = arith.constant 0 : i32
    %16 = arith.cmpi ne, %15, %c0_i32_12 : i32
    scf.if %16 {
      %c0_13 = arith.constant 0 : index
      %c0_14 = arith.constant 0 : index
      %17 = vector.load %arg8[%c0_13, %c0_14] : memref<8x128xf32, #tpu.memory_space<vmem>>, vector<8x128xf32>
      %c0_15 = arith.constant 0 : index
      %c0_16 = arith.constant 0 : index
      %18 = vector.load %arg5[%c0_15, %c0_16] : memref<1x128xf32, #tpu.memory_space<vmem>>, vector<1x128xf32>
      %19 = vector.broadcast %18 : vector<1x128xf32> to vector<8x128xf32>
      %20 = arith.addf %17, %19 : vector<8x128xf32>
      %c0_17 = arith.constant 0 : index
      %c0_18 = arith.constant 0 : index
      %21 = vector.load %arg8[%c0_17, %c0_18] : memref<8x128xf32, #tpu.memory_space<vmem>>, vector<8x128xf32>
      tpu.vector_store %arg8[%c0_17, %c0_18], %20 {strides = array<i32>} : memref<8x128xf32, #tpu.memory_space<vmem>>, vector<8x128xf32>,
      %c0_19 = arith.constant 0 : index
      %c0_20 = arith.constant 0 : index
      %22 = vector.load %arg9[%c0_19, %c0_20] : memref<8x128xf32, #tpu.memory_space<vmem>>, vector<8x128xf32>
      %23 = arith.truncf %20 : vector<8x128xf32> to vector<8x128xbf16>
      %c0_21 = arith.constant 0 : index
      %c0_22 = arith.constant 0 : index
      %24 = vector.load %arg6[%c0_21, %c0_22] : memref<128x128xbf16, #tpu.memory_space<vmem>>, vector<128x128xbf16>
      %cst_23 = arith.constant dense<0.000000e+00> : vector<8x128xf32>
      %25 = tpu.matmul %23, %24, %cst_23 {dimension_numbers = #tpu.dot_dimension_numbers<[1], [0], [0], [1], [0, 0, 1, 1], [], []>} : vector<8x128xbf16>, vector<128x128xbf16>, vector<8x128xf32> -> vector<8x128xf32>
      %26 = arith.addf %22, %25 : vector<8x128xf32>
      %c0_24 = arith.constant 0 : index
      %c0_25 = arith.constant 0 : index
      %27 = vector.load %arg9[%c0_24, %c0_25] : memref<8x128xf32, #tpu.memory_space<vmem>>, vector<8x128xf32>
      tpu.vector_store %arg9[%c0_24, %c0_25], %26 {strides = array<i32>} : memref<8x128xf32, #tpu.memory_space<vmem>>, vector<8x128xf32>,
    } else {
    }
    return
  }
  func.func @transform_0(%arg0: i32, %arg1: i32, %arg2: i32) -> (i32, i32) {
    %c0_i32 = arith.constant 0 : i32
    return %arg0, %arg2 : i32, i32
  }
  func.func @transform_1(%arg0: i32, %arg1: i32, %arg2: i32) -> (i32, i32) {
    %c0_i32 = arith.constant 0 : i32
    return %arg2, %arg1 : i32, i32
  }
  func.func @transform_2(%arg0: i32, %arg1: i32, %arg2: i32) -> (i32, i32) {
    %c0_i32 = arith.constant 0 : i32
    %c0_i32_0 = arith.constant 0 : i32
    return %c0_i32, %arg1 : i32, i32
  }
  func.func @transform_3(%arg0: i32, %arg1: i32, %arg2: i32) -> (i32, i32) {
    %c0_i32 = arith.constant 0 : i32
    %c0_i32_0 = arith.constant 0 : i32
    return %arg1, %c0_i32 : i32, i32
  }
  func.func @transform_4(%arg0: i32, %arg1: i32, %arg2: i32) -> (i32, i32) {
    %c0_i32 = arith.constant 0 : i32
    %c0_i32_0 = arith.constant 0 : i32
    %c0_i32_1 = arith.constant 0 : i32
    return %c0_i32, %c0_i32_0 : i32, i32
  }
  func.func @transform_5(%arg0: i32, %arg1: i32, %arg2: i32) -> (i32, i32) {
    %c0_i32 = arith.constant 0 : i32
    return %arg0, %arg1 : i32, i32
  }
  func.func @transform_6(%arg0: i32, %arg1: i32, %arg2: i32) -> (i32, i32) {
    %c0_i32 = arith.constant 0 : i32
    %c0_i32_0 = arith.constant 0 : i32
    return %arg0, %c0_i32 : i32, i32
  }
}

</mosaic_0001>

<llo_original>
// kernel: tpu_custom_call.1
$region0: #{tpu_custom_call.1}
  #allocation0 [shape = 'u32[]', space=smem, size = 0x4, offset = 0x4, fixed_abs, tag = 'smem constant byte address 0x4 - core index']
  #allocation1 [shape = 'u32[144,128]{1,0:T(1,128)}', space=vmem, size = 0x12000, scoped, tag = 'internal scratch']
  %s0 = inlined_call_operand.hbm [shape: bf16[8,256], index: 0, kind: input, shape index: {}]
  %s1 = inlined_call_operand.hbm [shape: bf16[256,128], index: 1, kind: input, shape index: {}]
  %s2 = inlined_call_operand.vmem [shape: f32[1,128], index: 2, kind: input, shape index: {}]
  %s3 = inlined_call_operand.hbm [shape: bf16[128,128], index: 3, kind: input, shape index: {}]
  %s4 = inlined_call_operand.vmem [shape: f32[1,128], index: 4, kind: input, shape index: {}]
  %s5 = inlined_call_operand.hbm [shape: f32[8,128], index: 5, kind: output, shape index: {0}]
  %s6 = inlined_call_operand.hbm [shape: f32[8,128], index: 6, kind: output, shape index: {1}]
  %7 = xla_tuple %s5, %s6
  %s8 = sld [smem:[#allocation0]]
  $region62: #{tpu_custom_call.1} parent=0
    _
  %s10 = ssub.s32 1, %s8
  %s11 = scalar_select 0, %s10, %s8
  $region1: #{tpu_custom_call.1} parent=0
    #allocation2 [shape = 'u8[4096]{0}', space=vmem, size = 0x1000, scoped, tag = 'input window, operand 0, single buffered']
    #allocation3 [shape = 's32[1]{0}', space=sflag, size = 0x4, scoped, tag = 'scoped memory for tpu_custom_call.1']
    #allocation4 [shape = 's32[1]{0}', space=sflag, size = 0x4, scoped, tag = 'scoped memory for tpu_custom_call.1']
    #allocation5 [shape = 'u8[65536]{0}', space=vmem, size = 0x10000, scoped, tag = 'input window, operand 1, single buffered']
    #allocation6 [shape = 's32[1]{0}', space=sflag, size = 0x4, scoped, tag = 'scoped memory for tpu_custom_call.1']
    #allocation7 [shape = 'u8[32768]{0}', space=vmem, size = 0x8000, scoped, tag = 'input window, operand 3, single buffered']
    #allocation8 [shape = 'u8[4096]{0}', space=vmem, size = 0x1000, scoped, tag = 'output window, operand 0, single buffered']
    #allocation9 [shape = 'u8[4096]{0}', space=vmem, size = 0x1000, scoped, tag = 'output window, operand 1, single buffered']
    #allocation10 [shape = 's32[1]{0}', space=sflag, size = 0x4, scoped, tag = 'scoped memory for tpu_custom_call.1']
    %12 = vsyncpa [#allocation3], 0
    %13 = vsyncpa [#allocation6], 0
    %14 = vsyncpa [#allocation4], 0
    %15 = vsyncpa [#allocation10], 0
    // Predicated region
    $region2: #{tpu_custom_call.1} parent=1 // pred_check
      _
    $region3: #{tpu_custom_call.1} parent=1 // pred_check_branch
      %17 = sbr.rel (0) target = $region5
    $region4: #{tpu_custom_call.1} parent=1 // pred_region
      %s19 = ssub.s32 128, 128
      %20 = vsyncadd [#allocation3], %s19
      %s22 = sshll.u32 [#allocation2], 4
      %s23 = int_to_ptr.vmem [resolvable:$true] %s22
      %25 = dma.hbm_to_vmem [thread:$0]  %s0, 128, %s23, [#allocation3]
    $region5: #{tpu_custom_call.1} parent=1 // pred_fallthru
      _
    // Predicated region
    $region6: #{tpu_custom_call.1} parent=1 // pred_check
      _
    $region7: #{tpu_custom_call.1} parent=1 // pred_check_branch
      %27 = sbr.rel (0) target = $region9
    $region8: #{tpu_custom_call.1} parent=1 // pred_region
      %s29 = ssub.s32 2048, 2048
      %30 = vsyncadd [#allocation6], %s29
      %s31 = sshll.u32 [#allocation5], 4
      %s32 = int_to_ptr.vmem [resolvable:$true] %s31
      %37 = dma.hbm_to_vmem [thread:$0]  %s1, 2048, %s32, [#allocation6], 64, 64, 4
    $region9: #{tpu_custom_call.1} parent=1 // pred_fallthru
      _
    // Predicated region
    $region10: #{tpu_custom_call.1} parent=1 // pred_check
      _
    $region11: #{tpu_custom_call.1} parent=1 // pred_check_branch
      %39 = sbr.rel (0) target = $region13
    $region12: #{tpu_custom_call.1} parent=1 // pred_region
      _
    $region13: #{tpu_custom_call.1} parent=1 // pred_fallthru
      _
    // Predicated region
    $region14: #{tpu_custom_call.1} parent=1 // pred_check
      _
    $region15: #{tpu_custom_call.1} parent=1 // pred_check_branch
      %41 = sbr.rel (0) target = $region17
    $region16: #{tpu_custom_call.1} parent=1 // pred_region
      %s43 = ssub.s32 1024, 1024
      %44 = vsyncadd [#allocation6], %s43
      %s45 = sshll.u32 [#allocation7], 4
      %s46 = int_to_ptr.vmem [resolvable:$true] %s45
      %51 = dma.hbm_to_vmem [thread:$0]  %s3, 1024, %s46, [#allocation6], 64, 64, 4
    $region17: #{tpu_custom_call.1} parent=1 // pred_fallthru
      _
    // Predicated region
    $region18: #{tpu_custom_call.1} parent=1 // pred_check
      _
    $region19: #{tpu_custom_call.1} parent=1 // pred_check_branch
      %53 = sbr.rel (0) target = $region21
    $region20: #{tpu_custom_call.1} parent=1 // pred_region
      _
    $region21: #{tpu_custom_call.1} parent=1 // pred_fallthru
      _
    // Predicated region
    $region22: #{tpu_custom_call.1} parent=1 // pred_check
      _
    $region23: #{tpu_custom_call.1} parent=1 // pred_check_branch
      %55 = sbr.rel (0) target = $region25
    $region24: #{tpu_custom_call.1} parent=1 // pred_region
      %56 = dma.done [#allocation3], 128
    $region25: #{tpu_custom_call.1} parent=1 // pred_fallthru
      _
    // Predicated region
    $region26: #{tpu_custom_call.1} parent=1 // pred_check
      _
    $region27: #{tpu_custom_call.1} parent=1 // pred_check_branch
      %58 = sbr.rel (0) target = $region29
    $region28: #{tpu_custom_call.1} parent=1 // pred_region
      %59 = dma.done [#allocation6], 2048
    $region29: #{tpu_custom_call.1} parent=1 // pred_fallthru
      _
    // Predicated region
    $region30: #{tpu_custom_call.1} parent=1 // pred_check
      _
    $region31: #{tpu_custom_call.1} parent=1 // pred_check_branch
      %61 = sbr.rel (0) target = $region33
    $region32: #{tpu_custom_call.1} parent=1 // pred_region
      %62 = dma.done [#allocation6], 1024
    $region33: #{tpu_custom_call.1} parent=1 // pred_fallthru
      _
    %p64 = scmp.eq.s32.totalorder 0, 0
    // Predicated region
    $region34: #{tpu_custom_call.1} parent=1 // pred_check
      %p65 = pneg %p64
    $region35: #{tpu_custom_call.1} parent=1 // pred_check_branch
      %67 = sbr.rel (%p65) target = $region37
    $region36: #{tpu_custom_call.1} parent=1 // pred_region
      %68 = vst [vmem:[#allocation8] sm:$0xff] 0.0
    $region37: #{tpu_custom_call.1} parent=1 // pred_fallthru
      _
    %p69 = scmp.eq.s32.totalorder 0, 0
    %p70 = pnand %p69, %p64
    %p71 = pneg %p70
    // Predicated region
    $region38: #{tpu_custom_call.1} parent=1 // pred_check
      _
    $region39: #{tpu_custom_call.1} parent=1 // pred_check_branch
      %73 = sbr.rel (%p70) target = $region41
    $region40: #{tpu_custom_call.1} parent=1 // pred_region
      %v74 = vld [vmem:[%s4] sm:$0x1]
      %v76 = vlaneseq
      %v77 = vshrl.u32 %v76, 7
      %v78 = vsub.s32 0, %v77
      %v79 = vrot.slane %v74, %v78
      %81 = vst [vmem:[#allocation9] sm:$0xff] %v79
    $region41: #{tpu_custom_call.1} parent=1 // pred_fallthru
      _
    %v82 = vld [vmem:[#allocation8] sm:$0xff]
    %v83 = vld [vmem:[#allocation2] sm:$0xff]
    %v84 = vld [vmem:[#allocation5] sm:$0xf]
    %v85 = vld [vmem:[#allocation5 + $0x4] sm:$0xf]
    %v86 = vld [vmem:[#allocation5 + $0x8] sm:$0xf]
    %v87 = vld [vmem:[#allocation5 + $0xc] sm:$0xf]
    %v88 = vld [vmem:[#allocation5 + $0x10] sm:$0xf]
    %v89 = vld [vmem:[#allocation5 + $0x14] sm:$0xf]
    %v90 = vld [vmem:[#allocation5 + $0x18] sm:$0xf]
    %v91 = vld [vmem:[#allocation5 + $0x1c] sm:$0xf]
    %v92 = vld [vmem:[#allocation5 + $0x20] sm:$0xf]
    %v93 = vld [vmem:[#allocation5 + $0x24] sm:$0xf]
    %v94 = vld [vmem:[#allocation5 + $0x28] sm:$0xf]
    %v95 = vld [vmem:[#allocation5 + $0x2c] sm:$0xf]
    %v96 = vld [vmem:[#allocation5 + $0x30] sm:$0xf]
    %v97 = vld [vmem:[#allocation5 + $0x34] sm:$0xf]
    %v98 = vld [vmem:[#allocation5 + $0x38] sm:$0xf]
    %v99 = vld [vmem:[#allocation5 + $0x3c] sm:$0xf]
    %v100 = vld [vmem:[#allocation5 + $0x40] sm:$0xf]
    %v101 = vld [vmem:[#allocation5 + $0x44] sm:$0xf]
    %v102 = vld [vmem:[#allocation5 + $0x48] sm:$0xf]
    %v103 = vld [vmem:[#allocation5 + $0x4c] sm:$0xf]
    %v104 = vld [vmem:[#allocation5 + $0x50] sm:$0xf]
    %v105 = vld [vmem:[#allocation5 + $0x54] sm:$0xf]
    %v106 = vld [vmem:[#allocation5 + $0x58] sm:$0xf]
    %v107 = vld [vmem:[#allocation5 + $0x5c] sm:$0xf]
    %v108 = vld [vmem:[#allocation5 + $0x60] sm:$0xf]
    %v109 = vld [vmem:[#allocation5 + $0x64] sm:$0xf]
    %v110 = vld [vmem:[#allocation5 + $0x68] sm:$0xf]
    %v111 = vld [vmem:[#allocation5 + $0x6c] sm:$0xf]
    %v112 = vld [vmem:[#allocation5 + $0x70] sm:$0xf]
    %v113 = vld [vmem:[#allocation5 + $0x74] sm:$0xf]
    %v114 = vld [vmem:[#allocation5 + $0x78] sm:$0xf]
    %v115 = vld [vmem:[#allocation5 + $0x7c] sm:$0xf]
    %v117 = vunpack.c.l.b16 %v83
    %v118 = vunpack.c.h.b16 %v83
    %v119 = vpack.c.b16 %v117, %v117
    %v120 = vpack.c.b16 %v118, %v118
    %v155 = vunpack.c.l.b16 %v84
    %v156 = vunpack.c.l.b16 %v85
    %v157 = vunpack.c.l.b16 %v86
    %v158 = vunpack.c.l.b16 %v87
    %v159 = vunpack.c.l.b16 %v88
    %v160 = vunpack.c.l.b16 %v89
    %v161 = vunpack.c.l.b16 %v90
    %v162 = vunpack.c.l.b16 %v91
    %v163 = vunpack.c.l.b16 %v92
    %v164 = vunpack.c.l.b16 %v93
    %v165 = vunpack.c.l.b16 %v94
    %v166 = vunpack.c.l.b16 %v95
    %v167 = vunpack.c.l.b16 %v96
    %v168 = vunpack.c.l.b16 %v97
    %v169 = vunpack.c.l.b16 %v98
    %v170 = vunpack.c.l.b16 %v99
    %v171 = vunpack.c.l.b16 %v100
    %v172 = vunpack.c.l.b16 %v101
    %v173 = vunpack.c.l.b16 %v102
    %v174 = vunpack.c.l.b16 %v103
    %v175 = vunpack.c.l.b16 %v104
    %v176 = vunpack.c.l.b16 %v105
    %v177 = vunpack.c.l.b16 %v106
    %v178 = vunpack.c.l.b16 %v107
    %v179 = vunpack.c.l.b16 %v108
    %v180 = vunpack.c.l.b16 %v109
    %v181 = vunpack.c.l.b16 %v110
    %v182 = vunpack.c.l.b16 %v111
    %v183 = vunpack.c.l.b16 %v112
    %v184 = vunpack.c.l.b16 %v113
    %v185 = vunpack.c.l.b16 %v114
    %v186 = vunpack.c.l.b16 %v115
    %v187 = vpack.c.b16 %v156, %v155
    %v188 = vpack.c.b16 %v158, %v157
    %v189 = vpack.c.b16 %v160, %v159
    %v190 = vpack.c.b16 %v162, %v161
    %v191 = vpack.c.b16 %v164, %v163
    %v192 = vpack.c.b16 %v166, %v165
    %v193 = vpack.c.b16 %v168, %v167
    %v194 = vpack.c.b16 %v170, %v169
    %v195 = vpack.c.b16 %v172, %v171
    %v196 = vpack.c.b16 %v174, %v173
    %v197 = vpack.c.b16 %v176, %v175
    %v198 = vpack.c.b16 %v178, %v177
    %v199 = vpack.c.b16 %v180, %v179
    %v200 = vpack.c.b16 %v182, %v181
    %v201 = vpack.c.b16 %v184, %v183
    %v202 = vpack.c.b16 %v186, %v185
    %219 = vmatprep.subr.bf16.mxu0 0
    %220 = vmatpush1.bf16.msra.mxu0 %v187
    %221 = vmatprep.subr.bf16.mxu0 0
    %222 = vmatpush1.bf16.msra.mxu0 %v188
    %223 = vmatprep.subr.bf16.mxu0 0
    %224 = vmatpush1.bf16.msra.mxu0 %v189
    %225 = vmatprep.subr.bf16.mxu0 0
    %226 = vmatpush1.bf16.msra.mxu0 %v190
    %227 = vmatprep.subr.bf16.mxu0 0
    %228 = vmatpush1.bf16.msra.mxu0 %v191
    %229 = vmatprep.subr.bf16.mxu0 0
    %230 = vmatpush1.bf16.msra.mxu0 %v192
    %231 = vmatprep.subr.bf16.mxu0 0
    %232 = vmatpush1.bf16.msra.mxu0 %v193
    %233 = vmatprep.subr.bf16.mxu0 0
    %234 = vmatpush1.bf16.msra.mxu0 %v194
    %235 = vmatprep.subr.bf16.mxu0 0
    %236 = vmatpush1.bf16.msra.mxu0 %v195
    %237 = vmatprep.subr.bf16.mxu0 0
    %238 = vmatpush1.bf16.msra.mxu0 %v196
    %239 = vmatprep.subr.bf16.mxu0 0
    %240 = vmatpush1.bf16.msra.mxu0 %v197
    %241 = vmatprep.subr.bf16.mxu0 0
    %242 = vmatpush1.bf16.msra.mxu0 %v198
    %243 = vmatprep.subr.bf16.mxu0 0
    %244 = vmatpush1.bf16.msra.mxu0 %v199
    %245 = vmatprep.subr.bf16.mxu0 0
    %246 = vmatpush1.bf16.msra.mxu0 %v200
    %247 = vmatprep.subr.bf16.mxu0 0
    %248 = vmatpush1.bf16.msra.mxu0 %v201
    %249 = vmatprep.subr.bf16.mxu0 0
    %250 = vmatpush1.bf16.msra.mxu0 %v202
    %251 = vmatprep.mubr.bf16.mxu0 %v120
    %252 = vmatmul.mubr.bf16.gmra.mrb[0].mxu0 %v119
    %v253 = vpop.f32.mrb[0].mxu0
    %v254 = vadd.f32 0.0, %v253
    %v255 = vpop.f32.mrb[0].mxu0
    %v256 = vpop.f32.mrb[0].mxu0
    %v257 = vpop.f32.mrb[0].mxu0
    %258 = vdwg.mxu0
    %v259 = vadd.f32 %v82, %v254
    %260 = vst [vmem:[#allocation8] sm:$0xff] %v259
    // Predicated region
    $region42: #{tpu_custom_call.1} parent=1 // pred_check
      %p261 = pneg %p64
    $region43: #{tpu_custom_call.1} parent=1 // pred_check_branch
      %263 = sbr.rel (%p261) target = $region45
    $region44: #{tpu_custom_call.1} parent=1 // pred_region
      %v264 = vld [vmem:[#allocation8] sm:$0xff]
      %v265 = vld [vmem:[%s2] sm:$0x1]
      %v267 = vlaneseq
      %v268 = vshrl.u32 %v267, 7
      %v269 = vsub.s32 0, %v268
      %v270 = vrot.slane %v265, %v269
      %v272 = vadd.f32 %v264, %v270
      %273 = vst [vmem:[#allocation8] sm:$0xff] %v272
      %v274 = vld [vmem:[#allocation9] sm:$0xff]
      %v275 = vpack.c.bf16 %v272, %v272
      %v276 = vld [vmem:[#allocation7] sm:$0xf]
      %v277 = vld [vmem:[#allocation7 + $0x4] sm:$0xf]
      %v278 = vld [vmem:[#allocation7 + $0x8] sm:$0xf]
      %v279 = vld [vmem:[#allocation7 + $0xc] sm:$0xf]
      %v280 = vld [vmem:[#allocation7 + $0x10] sm:$0xf]
      %v281 = vld [vmem:[#allocation7 + $0x14] sm:$0xf]
      %v282 = vld [vmem:[#allocation7 + $0x18] sm:$0xf]
      %v283 = vld [vmem:[#allocation7 + $0x1c] sm:$0xf]
      %v284 = vld [vmem:[#allocation7 + $0x20] sm:$0xf]
      %v285 = vld [vmem:[#allocation7 + $0x24] sm:$0xf]
      %v286 = vld [vmem:[#allocation7 + $0x28] sm:$0xf]
      %v287 = vld [vmem:[#allocation7 + $0x2c] sm:$0xf]
      %v288 = vld [vmem:[#allocation7 + $0x30] sm:$0xf]
      %v289 = vld [vmem:[#allocation7 + $0x34] sm:$0xf]
      %v290 = vld [vmem:[#allocation7 + $0x38] sm:$0xf]
      %v291 = vld [vmem:[#allocation7 + $0x3c] sm:$0xf]
      %v308 = vunpack.c.l.b16 %v276
      %v309 = vunpack.c.l.b16 %v277
      %v310 = vunpack.c.l.b16 %v278
      %v311 = vunpack.c.l.b16 %v279
      %v312 = vunpack.c.l.b16 %v280
      %v313 = vunpack.c.l.b16 %v281
      %v314 = vunpack.c.l.b16 %v282
      %v315 = vunpack.c.l.b16 %v283
      %v316 = vunpack.c.l.b16 %v284
      %v317 = vunpack.c.l.b16 %v285
      %v318 = vunpack.c.l.b16 %v286
      %v319 = vunpack.c.l.b16 %v287
      %v320 = vunpack.c.l.b16 %v288
      %v321 = vunpack.c.l.b16 %v289
      %v322 = vunpack.c.l.b16 %v290
      %v323 = vunpack.c.l.b16 %v291
      %v324 = vpack.c.b16 %v309, %v308
      %v325 = vpack.c.b16 %v311, %v310
      %v326 = vpack.c.b16 %v313, %v312
      %v327 = vpack.c.b16 %v315, %v314
      %v328 = vpack.c.b16 %v317, %v316
      %v329 = vpack.c.b16 %v319, %v318
      %v330 = vpack.c.b16 %v321, %v320
      %v331 = vpack.c.b16 %v323, %v322
      %340 = vmatprep.subr.bf16.mxu0 0
      %341 = vmatpush1.bf16.msra.mxu0 %v324
      %342 = vmatprep.subr.bf16.mxu0 0
      %343 = vmatpush1.bf16.msra.mxu0 %v325
      %344 = vmatprep.subr.bf16.mxu0 0
      %345 = vmatpush1.bf16.msra.mxu0 %v326
      %346 = vmatprep.subr.bf16.mxu0 0
      %347 = vmatpush1.bf16.msra.mxu0 %v327
      %348 = vmatprep.subr.bf16.mxu0 0
      %349 = vmatpush1.bf16.msra.mxu0 %v328
      %350 = vmatprep.subr.bf16.mxu0 0
      %351 = vmatpush1.bf16.msra.mxu0 %v329
      %352 = vmatprep.subr.bf16.mxu0 0
      %353 = vmatpush1.bf16.msra.mxu0 %v330
      %354 = vmatprep.subr.bf16.mxu0 0
      %355 = vmatpush1.bf16.msra.mxu0 %v331
      %356 = vmatprep.subr.bf16.mxu0 0
      %357 = vmatpush1.bf16.msra.mxu0 0
      %358 = vmatprep.subr.bf16.mxu0 0
      %359 = vmatpush1.bf16.msra.mxu0 0
      %360 = vmatprep.subr.bf16.mxu0 0
      %361 = vmatpush1.bf16.msra.mxu0 0
      %362 = vmatprep.subr.bf16.mxu0 0
      %363 = vmatpush1.bf16.msra.mxu0 0
      %364 = vmatprep.subr.bf16.mxu0 0
      %365 = vmatpush1.bf16.msra.mxu0 0
      %366 = vmatprep.subr.bf16.mxu0 0
      %367 = vmatpush1.bf16.msra.mxu0 0
      %368 = vmatprep.subr.bf16.mxu0 0
      %369 = vmatpush1.bf16.msra.mxu0 0
      %370 = vmatprep.subr.bf16.mxu0 0
      %371 = vmatpush1.bf16.msra.mxu0 0
      %372 = vmatprep.mubr.bf16.mxu0 0
      %373 = vmatmul.mubr.bf16.gmra.mrb[0].mxu0 %v275
      %v374 = vpop.f32.mrb[0].mxu0
      %v375 = vadd.f32 0.0, %v374
      %v376 = vpop.f32.mrb[0].mxu0
      %v377 = vpop.f32.mrb[0].mxu0
      %v378 = vpop.f32.mrb[0].mxu0
      %379 = vdwg.mxu0
      %v380 = vadd.f32 %v274, %v375
      %381 = vst [vmem:[#allocation9] sm:$0xff] %v380
    $region45: #{tpu_custom_call.1} parent=1 // pred_fallthru
      _
    // Predicated region
    $region46: #{tpu_custom_call.1} parent=1 // pred_check
      _
    $region47: #{tpu_custom_call.1} parent=1 // pred_check_branch
      %383 = sbr.rel (0) target = $region49
    $region48: #{tpu_custom_call.1} parent=1 // pred_region
      %s385 = ssub.s32 128, 128
      %386 = vsyncadd [#allocation4], %s385
      %s388 = sshll.u32 [#allocation8], 4
      %s389 = int_to_ptr.vmem [resolvable:$true] %s388
      %391 = dma.vmem_to_hbm [thread:$0]  %s389, 128, %s5, [#allocation4]
    $region49: #{tpu_custom_call.1} parent=1 // pred_fallthru
      _
    // Predicated region
    $region50: #{tpu_custom_call.1} parent=1 // pred_check
      _
    $region51: #{tpu_custom_call.1} parent=1 // pred_check_branch
      %393 = sbr.rel (0) target = $region53
    $region52: #{tpu_custom_call.1} parent=1 // pred_region
      %s395 = ssub.s32 128, 128
      %396 = vsyncadd [#allocation10], %s395
      %s398 = sshll.u32 [#allocation9], 4
      %s399 = int_to_ptr.vmem [resolvable:$true] %s398
      %401 = dma.vmem_to_hbm [thread:$0]  %s399, 128, %s6, [#allocation10]
    $region53: #{tpu_custom_call.1} parent=1 // pred_fallthru
      _
    // Predicated region
    $region54: #{tpu_custom_call.1} parent=1 // pred_check
      _
    $region55: #{tpu_custom_call.1} parent=1 // pred_check_branch
      %403 = sbr.rel (0) target = $region57
    $region56: #{tpu_custom_call.1} parent=1 // pred_region
      %404 = dma.done [#allocation4], 128
    $region57: #{tpu_custom_call.1} parent=1 // pred_fallthru
      _
    // Predicated region
    $region58: #{tpu_custom_call.1} parent=1 // pred_check
      _
    $region59: #{tpu_custom_call.1} parent=1 // pred_check_branch
      %406 = sbr.rel (0) target = $region61
    $region60: #{tpu_custom_call.1} parent=1 // pred_region
      %407 = dma.done [#allocation10], 128
    $region61: #{tpu_custom_call.1} parent=1 // pred_fallthru
      _
    %408 = vsyncpa [#allocation3], 1
    %409 = vsyncpa [#allocation6], 1
    %410 = vsyncpa [#allocation4], 1
    %411 = vsyncpa [#allocation10], 1

</llo_original>
